<compile_context>
chip_gen: v7x
topology: tpu7x:2x2x1
jax: 0.10.0
libtpu: 0.0.40
codegen_flags: <defaults>
</compile_context>

<pallas_src>
import jax
import jax.numpy as jnp
from jax.experimental import pallas as pl
from jax.experimental.pallas import tpu as pltpu


def _round_up(n, m):
    return ((n + m - 1) // m) * m


def _cdiv(a, b):
    return (a + b - 1) // b


def _vmem_capacity_bytes():
    """Physical VMEM per TensorCore; conservative v7x fallback if query fails."""
    try:
        info = pltpu.get_tpu_info()
        cap = int(getattr(info, "vmem_capacity_bytes", 0) or 0)
        if cap > 0:
            return cap
    except Exception:
        pass
    return 64 * 1024 * 1024


def _mlp_kernel(x_ref, w1_ref, b1_ref, w2_ref, b2_ref, w3_ref, b3_ref, o_ref):
    """One batch tile of the fused 3-layer MLP.

    x_ref  : (TB, D)    f32  -- batch tile (DMA-pipelined from HBM), cast in-kernel
    w1_ref : (D, 128)   cd   -- VMEM-resident across the whole grid
    b1_ref : (1, 128)   f32
    w2_ref : (128, 128) cd   -- hidden-2 zero-padded 64 -> 128
    b2_ref : (1, 128)   f32  -- zero-padded
    w3_ref : (128, 1)   cd   -- final weight column (rows 64..127 zero)
    b3_ref : (1, 1)     f32  -- SMEM scalar
    o_ref  : (TB, 1)    f32
    """
    x = x_ref[...].astype(w1_ref.dtype)

    # Layer 1: MXU matmul, f32 accumulate, f32 bias + ReLU.
    h1 = jnp.dot(x, w1_ref[...], preferred_element_type=jnp.float32) + b1_ref[...]
    h1 = jnp.maximum(h1, 0.0).astype(w2_ref.dtype)

    # Layer 2 (padded to a full 128-lane vreg width; padded lanes stay exactly 0).
    h2 = jnp.dot(h1, w2_ref[...], preferred_element_type=jnp.float32) + b2_ref[...]
    h2 = jnp.maximum(h2, 0.0).astype(w3_ref.dtype)

    # Layer 3 as a plain (TB,128)@(128,1) MXU mat-vec: the contraction axis is
    # already the lane axis of h2, so no XLU transpose of the h2 tile is needed.
    logit = jnp.dot(h2, w3_ref[...], preferred_element_type=jnp.float32)
    logit = logit + b3_ref[0, 0]

    o_ref[...] = jax.nn.sigmoid(logit)


def deep_rec_forward(x, params, *, tb=None, compute_dtype=jnp.bfloat16):
    """x: [B, input_dim] float32 -> [B, 1] float32 sigmoid scores."""
    w1, b1, w2, b2, w3, b3 = params
    B, D = x.shape
    H1 = w1.shape[1]                       # 128
    H2 = w2.shape[1]                       # 64
    H2P = _round_up(H2, 128)               # 128
    cd = compute_dtype

    # Kernel-side parameter layout (tiny, one-time): compute-dtype matmul
    # operands, f32 biases, hidden-2 zero-padded 64 -> 128.
    w1_k = w1.astype(cd)                                                   # (D, 128)
    b1_k = b1.reshape(1, H1).astype(jnp.float32)                           # (1, 128)
    w2_k = jnp.pad(w2, ((0, 0), (0, H2P - H2))).astype(cd)                 # (128, 128)
    b2_k = jnp.pad(b2.reshape(1, H2), ((0, 0), (0, H2P - H2))).astype(jnp.float32)
    w3_k = jnp.pad(w3, ((0, H2P - H2), (0, 0))).astype(cd)                 # (128, 1)
    b3_k = b3.reshape(1, 1).astype(jnp.float32)                            # SMEM scalar

    # Generation-aware batch tile: big tiles amortize the ~0.35us/step grid
    # overhead, capped by per-core VMEM (v5e/v6e: 128 MiB, v7x: 64 MiB).
    vmem_cap = _vmem_capacity_bytes()
    if vmem_cap >= 100 * 1024 * 1024:          # v5e / v6e (128 MiB VMEM)
        tb_default, vmem_limit = 8192, 96 * 1024 * 1024
    else:                                       # v7x (64 MiB VMEM per TensorCore)
        tb_default, vmem_limit = 6144, 48 * 1024 * 1024

    TB = _round_up(tb if tb is not None else tb_default, 128)
    # Keep >= 2 grid steps whenever the batch allows, so the "parallel" axis
    # actually feeds both TensorCores on v7x (and never exceed the batch much).
    TB = min(TB, _round_up(max(_cdiv(B, 2), 1), 128))
    G = _cdiv(B, TB)

    flops = 2 * B * (D * H1 + H1 * H2 + H2)
    bytes_accessed = int(x.size) * x.dtype.itemsize + B * 4 + sum(
        int(p.size) * 4 for p in params)
    cost = pl.CostEstimate(flops=flops, transcendentals=B,
                           bytes_accessed=bytes_accessed)

    out = pl.pallas_call(
        _mlp_kernel,
        out_shape=jax.ShapeDtypeStruct((G * TB, 1), jnp.float32),
        grid=(G,),
        in_specs=[
            # x: batch-tiled, double-buffered; the ragged last tile is handled
            # by Pallas partial-block semantics (OOB rows are garbage, each
            # output row depends only on its own input row, and the padded
            # output rows are sliced off below) -- no wrapper-side pad/cast.
            pl.BlockSpec((TB, D), lambda i: (i, 0)),
            pl.BlockSpec((D, H1), lambda i: (0, 0)),      # weights stay VMEM-resident
            pl.BlockSpec((1, H1), lambda i: (0, 0)),
            pl.BlockSpec((H1, H2P), lambda i: (0, 0)),
            pl.BlockSpec((1, H2P), lambda i: (0, 0)),
            pl.BlockSpec((H2P, 1), lambda i: (0, 0)),
            pl.BlockSpec(memory_space=pltpu.MemorySpace.SMEM),  # b3 scalar
        ],
        out_specs=pl.BlockSpec((TB, 1), lambda i: (i, 0)),
        compiler_params=pltpu.CompilerParams(
            dimension_semantics=("parallel",),      # megacore sharding on v7x
            vmem_limit_bytes=vmem_limit,
        ),
        cost_estimate=cost,
    )(x, w1_k, b1_k, w2_k, b2_k, w3_k, b3_k)

    return out[:B]


def init_params(key, input_dim=144):
    """Deterministic init mimicking nn.Linear's U(-1/sqrt(fan_in), 1/sqrt(fan_in))."""
    dims = [(input_dim, 128), (128, 64), (64, 1)]
    params = []
    for i, (fan_in, fan_out) in enumerate(dims):
        kw, kb, key = jax.random.split(jax.random.fold_in(key, i), 3)
        bound = 1.0 / jnp.sqrt(fan_in)
        w = jax.random.uniform(kw, (fan_in, fan_out), jnp.float32, -bound, bound)
        b = jax.random.uniform(kb, (1, fan_out), jnp.float32, -bound, bound)
        params.extend([w, b])
    return tuple(params)


def reference_forward(x, params, compute_dtype=jnp.bfloat16):
    """Mirrors the kernel's numerics (compute-dtype matmul operands, f32 accumulation)."""
    w1, b1, w2, b2, w3, b3 = params
    cd = compute_dtype
    h1 = jnp.maximum(
        jnp.dot(x.astype(cd), w1.astype(cd),
                preferred_element_type=jnp.float32) + b1.reshape(1, -1), 0.0)
    h2 = jnp.maximum(
        jnp.dot(h1.astype(cd), w2.astype(cd),
                preferred_element_type=jnp.float32) + b2.reshape(1, -1), 0.0)
    logit = jnp.dot(h2.astype(cd), w3.astype(cd),
                    preferred_element_type=jnp.float32) + b3.reshape(1, -1)
    return jax.nn.sigmoid(logit)


if __name__ == "__main__":
    key = jax.random.PRNGKey(0)
    input_dim = 144
    batch = 200            # not a multiple of 128 -> exercises the ragged last tile

    kx, kp = jax.random.split(key)
    x = jax.random.normal(kx, (batch, input_dim), dtype=jnp.float32)
    params = init_params(kp, input_dim)

    # Small explicit tile so the test runs a multi-step grid (G=2) + ragged tail.
    out = deep_rec_forward(x, params, tb=128)
    jax.block_until_ready(out)

    ref = reference_forward(x, params)
    assert out.shape == (batch, 1), out.shape
    max_err = float(jnp.max(jnp.abs(out - ref)))
    assert max_err < 2e-3, f"mismatch vs reference: {max_err}"

    print("KERNEL_OK")
</pallas_src>

<mosaic_0001>
module attributes {stable_mosaic.version = 11 : i64} {
  func.func @_mlp_kernel(%arg0: i32, %arg1: memref<128x144xf32, #tpu.memory_space<vmem>>, %arg2: memref<144x128xbf16, #tpu.memory_space<vmem>>, %arg3: memref<1x128xf32, #tpu.memory_space<vmem>>, %arg4: memref<128x128xbf16, #tpu.memory_space<vmem>>, %arg5: memref<1x128xf32, #tpu.memory_space<vmem>>, %arg6: memref<128x1xbf16, #tpu.memory_space<vmem>>, %arg7: memref<1x1xf32, #tpu.memory_space<smem>>, %arg8: memref<128x1xf32, #tpu.memory_space<vmem>>) attributes {dimension_semantics = [#tpu.dimension_semantics<parallel>], iteration_bounds = array<i64: 2>, scalar_prefetch = 0 : i64, scratch_operands = 0 : i64, tpu.core_type = #tpu.core_type<tc>, window_params = [{transform_indices = @transform_0, window_bounds = array<i64: 128, 144>}, {pipeline_mode = #tpu.pipeline_mode<synchronous>, transform_indices = @transform_1, window_bounds = array<i64: 144, 128>}, {pipeline_mode = #tpu.pipeline_mode<synchronous>, transform_indices = @transform_2, window_bounds = array<i64: 1, 128>}, {pipeline_mode = #tpu.pipeline_mode<synchronous>, transform_indices = @transform_3, window_bounds = array<i64: 128, 128>}, {pipeline_mode = #tpu.pipeline_mode<synchronous>, transform_indices = @transform_4, window_bounds = array<i64: 1, 128>}, {pipeline_mode = #tpu.pipeline_mode<synchronous>, transform_indices = @transform_5, window_bounds = array<i64: 128, 1>}, {transform_indices = @transform_6, window_bounds = array<i64: 1, 1>}, {transform_indices = @transform_7, window_bounds = array<i64: 128, 1>}]} {
    %c0 = arith.constant 0 : index
    %c0_0 = arith.constant 0 : index
    %0 = vector.load %arg1[%c0, %c0_0] : memref<128x144xf32, #tpu.memory_space<vmem>>, vector<128x144xf32>
    %1 = arith.truncf %0 : vector<128x144xf32> to vector<128x144xbf16>
    %c0_1 = arith.constant 0 : index
    %c0_2 = arith.constant 0 : index
    %2 = vector.load %arg2[%c0_1, %c0_2] : memref<144x128xbf16, #tpu.memory_space<vmem>>, vector<144x128xbf16>
    %cst = arith.constant dense<0.000000e+00> : vector<128x128xf32>
    %3 = tpu.matmul %1, %2, %cst {dimension_numbers = #tpu.dot_dimension_numbers<[1], [0], [0], [1], [0, 0, 1, 1], [], []>} : vector<128x144xbf16>, vector<144x128xbf16>, vector<128x128xf32> -> vector<128x128xf32>
    %c0_3 = arith.constant 0 : index
    %c0_4 = arith.constant 0 : index
    %4 = vector.load %arg3[%c0_3, %c0_4] : memref<1x128xf32, #tpu.memory_space<vmem>>, vector<1x128xf32>
    %5 = vector.broadcast %4 : vector<1x128xf32> to vector<128x128xf32>
    %6 = arith.addf %3, %5 : vector<128x128xf32>
    %cst_5 = arith.constant 0.000000e+00 : f32
    %7 = vector.broadcast %cst_5 : f32 to vector<128x128xf32>
    %8 = arith.maximumf %6, %7 : vector<128x128xf32>
    %9 = arith.truncf %8 : vector<128x128xf32> to vector<128x128xbf16>
    %c0_6 = arith.constant 0 : index
    %c0_7 = arith.constant 0 : index
    %10 = vector.load %arg4[%c0_6, %c0_7] : memref<128x128xbf16, #tpu.memory_space<vmem>>, vector<128x128xbf16>
    %cst_8 = arith.constant dense<0.000000e+00> : vector<128x128xf32>
    %11 = tpu.matmul %9, %10, %cst_8 {dimension_numbers = #tpu.dot_dimension_numbers<[1], [0], [0], [1], [0, 0, 1, 1], [], []>} : vector<128x128xbf16>, vector<128x128xbf16>, vector<128x128xf32> -> vector<128x128xf32>
    %c0_9 = arith.constant 0 : index
    %c0_10 = arith.constant 0 : index
    %12 = vector.load %arg5[%c0_9, %c0_10] : memref<1x128xf32, #tpu.memory_space<vmem>>, vector<1x128xf32>
    %13 = vector.broadcast %12 : vector<1x128xf32> to vector<128x128xf32>
    %14 = arith.addf %11, %13 : vector<128x128xf32>
    %cst_11 = arith.constant 0.000000e+00 : f32
    %15 = vector.broadcast %cst_11 : f32 to vector<128x128xf32>
    %16 = arith.maximumf %14, %15 : vector<128x128xf32>
    %17 = arith.truncf %16 : vector<128x128xf32> to vector<128x128xbf16>
    %c0_12 = arith.constant 0 : index
    %c0_13 = arith.constant 0 : index
    %18 = vector.load %arg6[%c0_12, %c0_13] : memref<128x1xbf16, #tpu.memory_space<vmem>>, vector<128x1xbf16>
    %cst_14 = arith.constant dense<0.000000e+00> : vector<128x1xf32>
    %19 = tpu.matmul %17, %18, %cst_14 {dimension_numbers = #tpu.dot_dimension_numbers<[1], [0], [0], [1], [0, 0, 1, 1], [], []>} : vector<128x128xbf16>, vector<128x1xbf16>, vector<128x1xf32> -> vector<128x1xf32>
    %c0_15 = arith.constant 0 : index
    %c0_16 = arith.constant 0 : index
    %20 = memref.load %arg7[%c0_15, %c0_16] : memref<1x1xf32, #tpu.memory_space<smem>>
    %21 = vector.broadcast %20 : f32 to vector<128x1xf32>
    %22 = arith.addf %19, %21 : vector<128x1xf32>
    %23 = arith.negf %22 : vector<128x1xf32>
    %24 = math.exp %23 : vector<128x1xf32>
    %cst_17 = arith.constant 1.000000e+00 : f32
    %25 = vector.broadcast %cst_17 : f32 to vector<128x1xf32>
    %26 = arith.addf %25, %24 : vector<128x1xf32>
    %27 = arith.divf %25, %26 : vector<128x1xf32>
    %c0_18 = arith.constant 0 : index
    %c0_19 = arith.constant 0 : index
    %28 = vector.load %arg8[%c0_18, %c0_19] : memref<128x1xf32, #tpu.memory_space<vmem>>, vector<128x1xf32>
    tpu.vector_store %arg8[%c0_18, %c0_19], %27 {strides = array<i32>} : memref<128x1xf32, #tpu.memory_space<vmem>>, vector<128x1xf32>,
    return
  }
  func.func @transform_0(%arg0: i32) -> (i32, i32) {
    %c0_i32 = arith.constant 0 : i32
    %c0_i32_0 = arith.constant 0 : i32
    return %arg0, %c0_i32 : i32, i32
  }
  func.func @transform_1(%arg0: i32) -> (i32, i32) {
    %c0_i32 = arith.constant 0 : i32
    %c0_i32_0 = arith.constant 0 : i32
    %c0_i32_1 = arith.constant 0 : i32
    return %c0_i32, %c0_i32_0 : i32, i32
  }
  func.func @transform_2(%arg0: i32) -> (i32, i32) {
    %c0_i32 = arith.constant 0 : i32
    %c0_i32_0 = arith.constant 0 : i32
    %c0_i32_1 = arith.constant 0 : i32
    return %c0_i32, %c0_i32_0 : i32, i32
  }
  func.func @transform_3(%arg0: i32) -> (i32, i32) {
    %c0_i32 = arith.constant 0 : i32
    %c0_i32_0 = arith.constant 0 : i32
    %c0_i32_1 = arith.constant 0 : i32
    return %c0_i32, %c0_i32_0 : i32, i32
  }
  func.func @transform_4(%arg0: i32) -> (i32, i32) {
    %c0_i32 = arith.constant 0 : i32
    %c0_i32_0 = arith.constant 0 : i32
    %c0_i32_1 = arith.constant 0 : i32
    return %c0_i32, %c0_i32_0 : i32, i32
  }
  func.func @transform_5(%arg0: i32) -> (i32, i32) {
    %c0_i32 = arith.constant 0 : i32
    %c0_i32_0 = arith.constant 0 : i32
    %c0_i32_1 = arith.constant 0 : i32
    return %c0_i32, %c0_i32_0 : i32, i32
  }
  func.func @transform_6(%arg0: i32) -> (i32, i32) {
    %c0_i32 = arith.constant 0 : i32
    %c0_i32_0 = arith.constant 0 : i32
    %c0_i32_1 = arith.constant 0 : i32
    return %c0_i32, %c0_i32_0 : i32, i32
  }
  func.func @transform_7(%arg0: i32) -> (i32, i32) {
    %c0_i32 = arith.constant 0 : i32
    %c0_i32_0 = arith.constant 0 : i32
    return %arg0, %c0_i32 : i32, i32
  }
}

</mosaic_0001>

<llo_original>
// kernel: tpu_custom_call.1
$region0: #{tpu_custom_call.1}
  #allocation0 [shape = 'u32[]', space=smem, size = 0x4, offset = 0x4, fixed_abs, tag = 'smem constant byte address 0x4 - core index']
  #allocation1 [shape = 'u32[144,128]{1,0:T(1,128)}', space=vmem, size = 0x12000, scoped, tag = 'internal scratch']
  #allocation2 [shape = 'f32[1,1]{1,0:T(1,128)S(6)}', space=smem, size = 0x200, scoped, tag = 'scoped memory for tpu_custom_call.1']
  %s0 = inlined_call_operand.vmem [shape: f32[200,144], index: 0, kind: input, shape index: {}]
  %s1 = inlined_call_operand.vmem [shape: bf16[144,128], index: 1, kind: input, shape index: {}]
  %s2 = inlined_call_operand.vmem [shape: f32[1,128], index: 2, kind: input, shape index: {}]
  %s3 = inlined_call_operand.vmem [shape: bf16[128,128], index: 3, kind: input, shape index: {}]
  %s4 = inlined_call_operand.vmem [shape: f32[1,128], index: 4, kind: input, shape index: {}]
  %s5 = inlined_call_operand.vmem [shape: bf16[128,1], index: 5, kind: input, shape index: {}]
  %s6 = inlined_call_operand.<no memory space> [shape: f32[1,1], index: 6, kind: input, shape index: {}]
  %s7 = inlined_call_operand.vmem [shape: f32[256,1], index: 7, kind: output, shape index: {}]
  %s8 = sld [smem:[#allocation0]]
  $region61: #{tpu_custom_call.1} parent=0
    _
  %s10 = ssub.s32 1, %s8
  %s11 = scalar_select 0, %s10, %s8
  %12 = sst [smem:[#allocation2]] %s6
  loop: start=0, step=1, limit=4
  $region2: #{tpu_custom_call.1} parent=0 // loop_pre_header
    _
  $region3: #{tpu_custom_call.1} parent=0 // loop_header
    %s14 = sphi 0, %s18
    %p15 = scmp.ge.s32.totalorder %s14, 4
    %s24 = sphi 0, %s26
    %s27 = sphi 0, %s24
    %s28 = sphi 0, %s27
    %s44 = sphi 0, %s28
    %s48 = sphi 0, %s48
    %s50 = sphi 0, %s48
    %s51 = sphi 0, %s50
    %s65 = sphi 0, %s51
    %s69 = sphi 0, %s69
    %s71 = sphi 0, %s69
    %s72 = sphi 0, %s71
    %s86 = sphi 0, %s72
    %s90 = sphi 0, %s90
    %s92 = sphi 0, %s90
    %s93 = sphi 0, %s92
    %s107 = sphi 0, %s93
    %s111 = sphi 0, %s111
    %s113 = sphi 0, %s111
    %s114 = sphi 0, %s113
    %s128 = sphi 0, %s114
    %s132 = sphi 0, %s132
    %s134 = sphi 0, %s132
    %s135 = sphi 0, %s134
    %s149 = sphi 0, %s135
    %s153 = sphi 0, %s153
    %s155 = sphi 0, %s153
    %s156 = sphi 0, %s155
    %s170 = sphi 0, %s156
    %s176 = sphi 0, %s178
    %s179 = sphi 0, %s176
    %s180 = sphi 0, %s179
    %s196 = sphi 0, %s180
  $region4: #{tpu_custom_call.1} parent=0 // loop_header_branch
    %17 = sbr.rel (%p15) target = $region8
  $region5: #{tpu_custom_call.1} parent=0 // loop_body
    %s19 = ssub.s32 %s14, 1
    %s20 = ssub.s32 %s14, 2
    %s21 = sadd.s32 %s14, 1
    %s22 = ssub.s32 %s14, %s21
    %p23 = scmp.eq.s32.totalorder %s22, 0
    %s25 = sadd.s32 %s24, 1
    %s26 = scalar_select %p23, %s24, %s25
    %p29 = pneg %p23
    %p30 = scmp.eq.s32.totalorder %s14, 1
    %p31 = por %p29, %p30
    %p32 = scmp.ne.s32.totalorder %s24, %s27
    %p33 = scmp.eq.s32.totalorder %s14, 0
    %p34 = por %p32, %p33
    %p35 = scmp.ne.s32.totalorder %s24, %s27
    %p36 = scmp.eq.s32.totalorder %s19, 1
    %p37 = por %p35, %p36
    %p38 = scmp.ne.s32.totalorder %s27, %s28
    %p39 = scmp.eq.s32.totalorder %s19, 0
    %p40 = por %p38, %p39
    %p41 = scmp.ne.s32.totalorder %s27, %s28
    %p42 = scmp.eq.s32.totalorder %s20, 1
    %p43 = por %p41, %p42
    %p45 = scmp.ne.s32.totalorder %s28, %s44
    %p46 = scmp.eq.s32.totalorder %s20, 0
    %p47 = por %p45, %p46
    %s49 = sadd.s32 %s48, 1
    %p52 = scmp.eq.s32.totalorder %s14, 1
    %p53 = scmp.ne.s32.totalorder %s48, %s50
    %p54 = scmp.eq.s32.totalorder %s14, 0
    %p55 = por %p53, %p54
    %p56 = scmp.ne.s32.totalorder %s48, %s50
    %p57 = scmp.eq.s32.totalorder %s19, 1
    %p58 = por %p56, %p57
    %p59 = scmp.ne.s32.totalorder %s50, %s51
    %p60 = scmp.eq.s32.totalorder %s19, 0
    %p61 = por %p59, %p60
    %p62 = scmp.ne.s32.totalorder %s50, %s51
    %p63 = scmp.eq.s32.totalorder %s20, 1
    %p64 = por %p62, %p63
    %p66 = scmp.ne.s32.totalorder %s51, %s65
    %p67 = scmp.eq.s32.totalorder %s20, 0
    %p68 = por %p66, %p67
    %s70 = sadd.s32 %s69, 1
    %p73 = scmp.eq.s32.totalorder %s14, 1
    %p74 = scmp.ne.s32.totalorder %s69, %s71
    %p75 = scmp.eq.s32.totalorder %s14, 0
    %p76 = por %p74, %p75
    %p77 = scmp.ne.s32.totalorder %s69, %s71
    %p78 = scmp.eq.s32.totalorder %s19, 1
    %p79 = por %p77, %p78
    %p80 = scmp.ne.s32.totalorder %s71, %s72
    %p81 = scmp.eq.s32.totalorder %s19, 0
    %p82 = por %p80, %p81
    %p83 = scmp.ne.s32.totalorder %s71, %s72
    %p84 = scmp.eq.s32.totalorder %s20, 1
    %p85 = por %p83, %p84
    %p87 = scmp.ne.s32.totalorder %s72, %s86
    %p88 = scmp.eq.s32.totalorder %s20, 0
    %p89 = por %p87, %p88
    %s91 = sadd.s32 %s90, 1
    %p94 = scmp.eq.s32.totalorder %s14, 1
    %p95 = scmp.ne.s32.totalorder %s90, %s92
    %p96 = scmp.eq.s32.totalorder %s14, 0
    %p97 = por %p95, %p96
    %p98 = scmp.ne.s32.totalorder %s90, %s92
    %p99 = scmp.eq.s32.totalorder %s19, 1
    %p100 = por %p98, %p99
    %p101 = scmp.ne.s32.totalorder %s92, %s93
    %p102 = scmp.eq.s32.totalorder %s19, 0
    %p103 = por %p101, %p102
    %p104 = scmp.ne.s32.totalorder %s92, %s93
    %p105 = scmp.eq.s32.totalorder %s20, 1
    %p106 = por %p104, %p105
    %p108 = scmp.ne.s32.totalorder %s93, %s107
    %p109 = scmp.eq.s32.totalorder %s20, 0
    %p110 = por %p108, %p109
    %s112 = sadd.s32 %s111, 1
    %p115 = scmp.eq.s32.totalorder %s14, 1
    %p116 = scmp.ne.s32.totalorder %s111, %s113
    %p117 = scmp.eq.s32.totalorder %s14, 0
    %p118 = por %p116, %p117
    %p119 = scmp.ne.s32.totalorder %s111, %s113
    %p120 = scmp.eq.s32.totalorder %s19, 1
    %p121 = por %p119, %p120
    %p122 = scmp.ne.s32.totalorder %s113, %s114
    %p123 = scmp.eq.s32.totalorder %s19, 0
    %p124 = por %p122, %p123
    %p125 = scmp.ne.s32.totalorder %s113, %s114
    %p126 = scmp.eq.s32.totalorder %s20, 1
    %p127 = por %p125, %p126
    %p129 = scmp.ne.s32.totalorder %s114, %s128
    %p130 = scmp.eq.s32.totalorder %s20, 0
    %p131 = por %p129, %p130
    %s133 = sadd.s32 %s132, 1
    %p136 = scmp.eq.s32.totalorder %s14, 1
    %p137 = scmp.ne.s32.totalorder %s132, %s134
    %p138 = scmp.eq.s32.totalorder %s14, 0
    %p139 = por %p137, %p138
    %p140 = scmp.ne.s32.totalorder %s132, %s134
    %p141 = scmp.eq.s32.totalorder %s19, 1
    %p142 = por %p140, %p141
    %p143 = scmp.ne.s32.totalorder %s134, %s135
    %p144 = scmp.eq.s32.totalorder %s19, 0
    %p145 = por %p143, %p144
    %p146 = scmp.ne.s32.totalorder %s134, %s135
    %p147 = scmp.eq.s32.totalorder %s20, 1
    %p148 = por %p146, %p147
    %p150 = scmp.ne.s32.totalorder %s135, %s149
    %p151 = scmp.eq.s32.totalorder %s20, 0
    %p152 = por %p150, %p151
    %s154 = sadd.s32 %s153, 1
    %p157 = scmp.eq.s32.totalorder %s14, 1
    %p158 = scmp.ne.s32.totalorder %s153, %s155
    %p159 = scmp.eq.s32.totalorder %s14, 0
    %p160 = por %p158, %p159
    %p161 = scmp.ne.s32.totalorder %s153, %s155
    %p162 = scmp.eq.s32.totalorder %s19, 1
    %p163 = por %p161, %p162
    %p164 = scmp.ne.s32.totalorder %s155, %s156
    %p165 = scmp.eq.s32.totalorder %s19, 0
    %p166 = por %p164, %p165
    %p167 = scmp.ne.s32.totalorder %s155, %s156
    %p168 = scmp.eq.s32.totalorder %s20, 1
    %p169 = por %p167, %p168
    %p171 = scmp.ne.s32.totalorder %s156, %s170
    %p172 = scmp.eq.s32.totalorder %s20, 0
    %p173 = por %p171, %p172
    %s174 = ssub.s32 %s14, %s21
    %p175 = scmp.eq.s32.totalorder %s174, 0
    %s177 = sadd.s32 %s176, 1
    %s178 = scalar_select %p175, %s176, %s177
    %p181 = pneg %p175
    %p182 = scmp.eq.s32.totalorder %s14, 1
    %p183 = por %p181, %p182
    %p184 = scmp.ne.s32.totalorder %s176, %s179
    %p185 = scmp.eq.s32.totalorder %s14, 0
    %p186 = por %p184, %p185
    %p187 = scmp.ne.s32.totalorder %s176, %s179
    %p188 = scmp.eq.s32.totalorder %s19, 1
    %p189 = por %p187, %p188
    %p190 = scmp.ne.s32.totalorder %s179, %s180
    %p191 = scmp.eq.s32.totalorder %s19, 0
    %p192 = por %p190, %p191
    %p193 = scmp.ne.s32.totalorder %s179, %s180
    %p194 = scmp.eq.s32.totalorder %s20, 1
    %p195 = por %p193, %p194
    %p197 = scmp.ne.s32.totalorder %s180, %s196
    %p198 = scmp.eq.s32.totalorder %s20, 0
    %p199 = por %p197, %p198
    %p200 = scmp.le.s32.totalorder 1, %s14
    %p201 = scmp.lt.s32.totalorder %s14, 3
    %p202 = pnand %p200, %p201
    %p203 = pneg %p202
    // Predicated region
    $region9: #{tpu_custom_call.1} parent=5 // pred_check
      _
    $region10: #{tpu_custom_call.1} parent=5 // pred_check_branch
      %205 = sbr.rel (%p202) target = $region12
    $region11: #{tpu_custom_call.1} parent=5 // pred_region
      %s206 = ssub.s32 %s14, 1
      // Predicated region
      $region13: #{tpu_custom_call.1} parent=11 // pred_check
        %p207 = pneg %p61
      $region14: #{tpu_custom_call.1} parent=11 // pred_check_branch
        %209 = sbr.rel (%p207) target = $region16
      $region15: #{tpu_custom_call.1} parent=11 // pred_region
        _
      $region16: #{tpu_custom_call.1} parent=11 // pred_fallthru
        _
      // Predicated region
      $region17: #{tpu_custom_call.1} parent=11 // pred_check
        %p210 = pneg %p82
      $region18: #{tpu_custom_call.1} parent=11 // pred_check_branch
        %212 = sbr.rel (%p210) target = $region20
      $region19: #{tpu_custom_call.1} parent=11 // pred_region
        _
      $region20: #{tpu_custom_call.1} parent=11 // pred_fallthru
        _
      // Predicated region
      $region21: #{tpu_custom_call.1} parent=11 // pred_check
        %p213 = pneg %p103
      $region22: #{tpu_custom_call.1} parent=11 // pred_check_branch
        %215 = sbr.rel (%p213) target = $region24
      $region23: #{tpu_custom_call.1} parent=11 // pred_region
        _
      $region24: #{tpu_custom_call.1} parent=11 // pred_fallthru
        _
      // Predicated region
      $region25: #{tpu_custom_call.1} parent=11 // pred_check
        %p216 = pneg %p124
      $region26: #{tpu_custom_call.1} parent=11 // pred_check_branch
        %218 = sbr.rel (%p216) target = $region28
      $region27: #{tpu_custom_call.1} parent=11 // pred_region
        _
      $region28: #{tpu_custom_call.1} parent=11 // pred_fallthru
        _
      // Predicated region
      $region29: #{tpu_custom_call.1} parent=11 // pred_check
        %p219 = pneg %p145
      $region30: #{tpu_custom_call.1} parent=11 // pred_check_branch
        %221 = sbr.rel (%p219) target = $region32
      $region31: #{tpu_custom_call.1} parent=11 // pred_region
        _
      $region32: #{tpu_custom_call.1} parent=11 // pred_fallthru
        _
      // Predicated region
      $region33: #{tpu_custom_call.1} parent=11 // pred_check
        %p222 = pneg %p166
      $region34: #{tpu_custom_call.1} parent=11 // pred_check_branch
        %224 = sbr.rel (%p222) target = $region36
      $region35: #{tpu_custom_call.1} parent=11 // pred_region
        _
      $region36: #{tpu_custom_call.1} parent=11 // pred_fallthru
        _
    $region12: #{tpu_custom_call.1} parent=5 // pred_fallthru
      _
    %p225 = scmp.lt.s32.totalorder %s14, 2
    // Predicated region
    $region37: #{tpu_custom_call.1} parent=5 // pred_check
      %p226 = pneg %p225
    $region38: #{tpu_custom_call.1} parent=5 // pred_check_branch
      %228 = sbr.rel (%p226) target = $region40
    $region39: #{tpu_custom_call.1} parent=5 // pred_region
      // Predicated region
      $region41: #{tpu_custom_call.1} parent=39 // pred_check
        %p229 = pneg %p34
      $region42: #{tpu_custom_call.1} parent=39 // pred_check_branch
        %231 = sbr.rel (%p229) target = $region44
      $region43: #{tpu_custom_call.1} parent=39 // pred_region
        %s232 = smul.u32 16, %s14
        %s233 = ssub.s32 25, %s232
        %p234 = scmp.lt.s32.totalorder %s233, 16
        %s235 = scalar_select %p234, %s233, 16
        %s236 = smul.u32 128, %s235
        %s237 = smul.u32 %s236, 2
        %p238 = scmp.lt.s32.totalorder %s232, 24
        %s239 = scalar_select %p238, %s232, 24
        %s240 = smul.addr %s239, 2
        %s241 = smul.addr %s240, 8
        %s242 = scalar_lea.vmem %s0, %s241
        %s243 = smul.u32 16, %s14
        %s244 = ssub.s32 25, %s243
        %p245 = scmp.lt.s32.totalorder %s244, 16
        %s246 = scalar_select %p245, %s244, 16
        %s247 = smul.u32 128, %s246
        %s248 = smul.u32 %s247, 2
      $region44: #{tpu_custom_call.1} parent=39 // pred_fallthru
        _
    $region40: #{tpu_custom_call.1} parent=5 // pred_fallthru
      _
    %p249 = scmp.le.s32.totalorder 1, %s14
    %p250 = scmp.lt.s32.totalorder %s14, 3
    %p251 = pnand %p249, %p250
    %p252 = pneg %p251
    // Predicated region
    $region45: #{tpu_custom_call.1} parent=5 // pred_check
      _
    $region46: #{tpu_custom_call.1} parent=5 // pred_check_branch
      %254 = sbr.rel (%p251) target = $region48
    $region47: #{tpu_custom_call.1} parent=5 // pred_region
      %s255 = ssub.s32 %s14, 1
      %s256 = smul.u32 16, %s19
      %s257 = ssub.s32 25, %s256
      %p258 = scmp.lt.s32.totalorder %s257, 16
      %s259 = scalar_select %p258, %s257, 16
      %s260 = smul.u32 128, %s259
      %s261 = smul.u32 %s260, 2
      %p262 = scmp.lt.s32.totalorder %s256, 24
      %s263 = scalar_select %p262, %s256, 24
      %s264 = smul.addr %s263, 2
      %s265 = smul.addr %s264, 8
      %s266 = scalar_lea.vmem %s0, %s265
      %p267 = pneg %p40
      %p268 = pneg %p37
      %p269 = pneg %p61
      %p270 = pneg %p58
      %p271 = pneg %p82
      %p272 = pneg %p79
      %p273 = pneg %p103
      %p274 = pneg %p100
      %p275 = pneg %p124
      %p276 = pneg %p121
      %p277 = pneg %p145
      %p278 = pneg %p142
      %p279 = pneg %p166
      %p280 = pneg %p163
      %p281 = pneg %p192
      %p282 = pneg %p189
      %s283 = smul.u32 16, %s19
      %p284 = scmp.lt.s32.totalorder %s283, 31
      %s285 = scalar_select %p284, %s283, 31
      %s286 = smul.addr %s285, 8
      %s287 = scalar_lea.vmem %s7, %s286
      %s288 = smul.u32 16, %s19
      %s289 = ssub.s32 25, %s288
      %p290 = scmp.lt.s32.totalorder %s289, 16
      %s291 = scalar_select %p290, %s289, 16
      %s292 = smul.u32 128, %s291
      %s293 = smul.u32 %s292, 2
      %p294 = scmp.lt.s32.totalorder %s288, 24
      %s295 = scalar_select %p294, %s288, 24
      %s296 = smul.addr %s295, 2
      %s297 = smul.addr %s296, 8
      %s298 = scalar_lea.vmem %s0, %s297
      %s299 = smul.u32 16, %s19
      %s300 = ssub.s32 25, %s299
      %p301 = scmp.lt.s32.totalorder %s300, 16
      %s302 = scalar_select %p301, %s300, 16
      %s303 = smul.u32 128, %s302
      %s304 = smul.u32 %s303, 2
      %s305 = smul.u32 16, %s19
      %p306 = scmp.lt.s32.totalorder %s305, 31
      %s307 = scalar_select %p306, %s305, 31
      %s308 = smul.addr %s307, 8
      %s309 = scalar_lea.vmem %s7, %s308
      %s310 = smul.u32 16, %s19
      %v312 = vld [vmem:[%s298] sm:$0xff]
      %v313 = vld [vmem:[%s298 + $0x8] sm:$0xff]
      %v314 = vld [vmem:[%s298 + $0x10] sm:$0xff]
      %v315 = vld [vmem:[%s298 + $0x18] sm:$0xff]
      %v316 = vld [vmem:[%s298 + $0x20] sm:$0xff]
      %v317 = vld [vmem:[%s298 + $0x28] sm:$0xff]
      %v318 = vld [vmem:[%s298 + $0x30] sm:$0xff]
      %v319 = vld [vmem:[%s298 + $0x38] sm:$0xff]
      %v320 = vld [vmem:[%s298 + $0x40] sm:$0xff]
      %v321 = vld [vmem:[%s298 + $0x48] sm:$0xff]
      %v322 = vld [vmem:[%s298 + $0x50] sm:$0xff]
      %v323 = vld [vmem:[%s298 + $0x58] sm:$0xff]
      %v324 = vld [vmem:[%s298 + $0x60] sm:$0xff]
      %v325 = vld [vmem:[%s298 + $0x68] sm:$0xff]
      %v326 = vld [vmem:[%s298 + $0x70] sm:$0xff]
      %v327 = vld [vmem:[%s298 + $0x78] sm:$0xff]
      %v328 = vld [vmem:[%s298 + $0x80] sm:$0xff]
      %v329 = vld [vmem:[%s298 + $0x88] sm:$0xff]
      %v330 = vld [vmem:[%s298 + $0x90] sm:$0xff]
      %v331 = vld [vmem:[%s298 + $0x98] sm:$0xff]
      %v332 = vld [vmem:[%s298 + $0xa0] sm:$0xff]
      %v333 = vld [vmem:[%s298 + $0xa8] sm:$0xff]
      %v334 = vld [vmem:[%s298 + $0xb0] sm:$0xff]
      %v335 = vld [vmem:[%s298 + $0xb8] sm:$0xff]
      %v336 = vld [vmem:[%s298 + $0xc0] sm:$0xff]
      %v337 = vld [vmem:[%s298 + $0xc8] sm:$0xff]
      %v338 = vld [vmem:[%s298 + $0xd0] sm:$0xff]
      %v339 = vld [vmem:[%s298 + $0xd8] sm:$0xff]
      %v340 = vld [vmem:[%s298 + $0xe0] sm:$0xff]
      %v341 = vld [vmem:[%s298 + $0xe8] sm:$0xff]
      %v342 = vld [vmem:[%s298 + $0xf0] sm:$0xff]
      %v343 = vld [vmem:[%s298 + $0xf8] sm:$0xff]
      %v344 = vpack.c.bf16 %v314, %v312
      %v345 = vpack.c.bf16 %v315, %v313
      %v346 = vpack.c.bf16 %v318, %v316
      %v347 = vpack.c.bf16 %v319, %v317
      %v348 = vpack.c.bf16 %v322, %v320
      %v349 = vpack.c.bf16 %v323, %v321
      %v350 = vpack.c.bf16 %v326, %v324
      %v351 = vpack.c.bf16 %v327, %v325
      %v352 = vpack.c.bf16 %v330, %v328
      %v353 = vpack.c.bf16 %v331, %v329
      %v354 = vpack.c.bf16 %v334, %v332
      %v355 = vpack.c.bf16 %v335, %v333
      %v356 = vpack.c.bf16 %v338, %v336
      %v357 = vpack.c.bf16 %v339, %v337
      %v358 = vpack.c.bf16 %v342, %v340
      %v359 = vpack.c.bf16 %v343, %v341
      %v360 = vld [vmem:[%s1] sm:$0xf]
      %v361 = vld [vmem:[%s1 + $0x4] sm:$0xf]
      %v362 = vld [vmem:[%s1 + $0x8] sm:$0xf]
      %v363 = vld [vmem:[%s1 + $0xc] sm:$0xf]
      %v364 = vld [vmem:[%s1 + $0x10] sm:$0xf]
      %v365 = vld [vmem:[%s1 + $0x14] sm:$0xf]
      %v366 = vld [vmem:[%s1 + $0x18] sm:$0xf]
      %v367 = vld [vmem:[%s1 + $0x1c] sm:$0xf]
      %v368 = vld [vmem:[%s1 + $0x20] sm:$0xf]
      %v369 = vld [vmem:[%s1 + $0x24] sm:$0xf]
      %v370 = vld [vmem:[%s1 + $0x28] sm:$0xf]
      %v371 = vld [vmem:[%s1 + $0x2c] sm:$0xf]
      %v372 = vld [vmem:[%s1 + $0x30] sm:$0xf]
      %v373 = vld [vmem:[%s1 + $0x34] sm:$0xf]
      %v374 = vld [vmem:[%s1 + $0x38] sm:$0xf]
      %v375 = vld [vmem:[%s1 + $0x3c] sm:$0xf]
      %v376 = vld [vmem:[%s1 + $0x40] sm:$0xf]
      %v377 = vld [vmem:[%s1 + $0x44] sm:$0xf]
      %v378 = vld [vmem:[%s2] sm:$0x1]
      %v380 = vlaneseq
      %v381 = vshrl.u32 %v380, 7
      %v382 = vsub.s32 0, %v381
      %v383 = vrot.slane %v378, %v382
      %v403 = vunpack.c.l.b16 %v360
      %v404 = vunpack.c.l.b16 %v361
      %v405 = vunpack.c.l.b16 %v362
      %v406 = vunpack.c.l.b16 %v363
      %v407 = vunpack.c.l.b16 %v364
      %v408 = vunpack.c.l.b16 %v365
      %v409 = vunpack.c.l.b16 %v366
      %v410 = vunpack.c.l.b16 %v367
      %v411 = vunpack.c.l.b16 %v368
      %v412 = vunpack.c.l.b16 %v369
      %v413 = vunpack.c.l.b16 %v370
      %v414 = vunpack.c.l.b16 %v371
      %v415 = vunpack.c.l.b16 %v372
      %v416 = vunpack.c.l.b16 %v373
      %v417 = vunpack.c.l.b16 %v374
      %v418 = vunpack.c.l.b16 %v375
      %v419 = vunpack.c.l.b16 %v376
      %v420 = vunpack.c.l.b16 %v377
      %v421 = vpack.c.b16 %v404, %v403
      %v422 = vpack.c.b16 %v406, %v405
      %v423 = vpack.c.b16 %v408, %v407
      %v424 = vpack.c.b16 %v410, %v409
      %v425 = vpack.c.b16 %v412, %v411
      %v426 = vpack.c.b16 %v414, %v413
      %v427 = vpack.c.b16 %v416, %v415
      %v428 = vpack.c.b16 %v418, %v417
      %v429 = vpack.c.b16 %v420, %v419
      %vm439 = vcmask 130048
      %v441 = vsel %vm439, %v345, 0
      %v444 = vsel %vm439, %v347, 0
      %v447 = vsel %vm439, %v349, 0
      %v450 = vsel %vm439, %v351, 0
      %v453 = vsel %vm439, %v353, 0
      %v456 = vsel %vm439, %v355, 0
      %v459 = vsel %vm439, %v357, 0
      %v462 = vsel %vm439, %v359, 0
      %464 = vmatprep.subr.bf16.mxu0 0
      %465 = vmatpush1.bf16.msra.mxu0 %v421
      %466 = vmatprep.subr.bf16.mxu0 0
      %467 = vmatpush1.bf16.msra.mxu0 %v422
      %468 = vmatprep.subr.bf16.mxu0 0
      %469 = vmatpush1.bf16.msra.mxu0 %v423
      %470 = vmatprep.subr.bf16.mxu0 0
      %471 = vmatpush1.bf16.msra.mxu0 %v424
      %472 = vmatprep.subr.bf16.mxu0 0
      %473 = vmatpush1.bf16.msra.mxu0 %v425
      %474 = vmatprep.subr.bf16.mxu0 0
      %475 = vmatpush1.bf16.msra.mxu0 %v426
      %476 = vmatprep.subr.bf16.mxu0 0
      %477 = vmatpush1.bf16.msra.mxu0 %v427
      %478 = vmatprep.subr.bf16.mxu0 0
      %479 = vmatpush1.bf16.msra.mxu0 %v428
      %480 = vmatprep.subr.bf16.mxu0 0
      %481 = vmatpush1.bf16.msra.mxu0 %v429
      %482 = vmatprep.subr.bf16.mxu0 0
      %483 = vmatpush1.bf16.msra.mxu0 0
      %484 = vmatprep.subr.bf16.mxu0 0
      %485 = vmatpush1.bf16.msra.mxu0 0
      %486 = vmatprep.subr.bf16.mxu0 0
      %487 = vmatpush1.bf16.msra.mxu0 0
      %488 = vmatprep.subr.bf16.mxu0 0
      %489 = vmatpush1.bf16.msra.mxu0 0
      %490 = vmatprep.subr.bf16.mxu0 0
      %491 = vmatpush1.bf16.msra.mxu0 0
      %492 = vmatprep.subr.bf16.mxu0 0
      %493 = vmatpush1.bf16.msra.mxu0 0
      %494 = vmatprep.subr.bf16.mxu0 0
      %495 = vmatpush1.bf16.msra.mxu0 0
      %496 = vmatprep.mubr.bf16.mxu0 %v441
      %497 = vmatmul.mubr.bf16.gmra.mrb[0].mxu0 %v344
      %v498 = vpop.f32.mrb[0].mxu0
      %v499 = vadd.f32 %v383, %v498
      %v500 = vpop.f32.mrb[0].mxu0
      %v501 = vpop.f32.mrb[0].mxu0
      %v502 = vadd.f32 %v383, %v501
      %v503 = vpop.f32.mrb[0].mxu0
      %504 = vmatprep.mubr.bf16.mxu0 %v444
      %505 = vmatmul.mubr.bf16.gmra.mrb[0].mxu0 %v346
      %v506 = vpop.f32.mrb[0].mxu0
      %v507 = vadd.f32 %v383, %v506
      %v508 = vpop.f32.mrb[0].mxu0
      %v509 = vpop.f32.mrb[0].mxu0
      %v510 = vadd.f32 %v383, %v509
      %v511 = vpop.f32.mrb[0].mxu0
      %512 = vmatprep.mubr.bf16.mxu0 %v447
      %513 = vmatmul.mubr.bf16.gmra.mrb[0].mxu0 %v348
      %v514 = vpop.f32.mrb[0].mxu0
      %v515 = vadd.f32 %v383, %v514
      %v516 = vpop.f32.mrb[0].mxu0
      %v517 = vpop.f32.mrb[0].mxu0
      %v518 = vadd.f32 %v383, %v517
      %v519 = vpop.f32.mrb[0].mxu0
      %520 = vmatprep.mubr.bf16.mxu0 %v450
      %521 = vmatmul.mubr.bf16.gmra.mrb[0].mxu0 %v350
      %v522 = vpop.f32.mrb[0].mxu0
      %v523 = vadd.f32 %v383, %v522
      %v524 = vpop.f32.mrb[0].mxu0
      %v525 = vpop.f32.mrb[0].mxu0
      %v526 = vadd.f32 %v383, %v525
      %v527 = vpop.f32.mrb[0].mxu0
      %528 = vmatprep.mubr.bf16.mxu0 %v453
      %529 = vmatmul.mubr.bf16.gmra.mrb[0].mxu0 %v352
      %v530 = vpop.f32.mrb[0].mxu0
      %v531 = vadd.f32 %v383, %v530
      %v532 = vpop.f32.mrb[0].mxu0
      %v533 = vpop.f32.mrb[0].mxu0
      %v534 = vadd.f32 %v383, %v533
      %v535 = vpop.f32.mrb[0].mxu0
      %536 = vmatprep.mubr.bf16.mxu0 %v456
      %537 = vmatmul.mubr.bf16.gmra.mrb[0].mxu0 %v354
      %v538 = vpop.f32.mrb[0].mxu0
      %v539 = vadd.f32 %v383, %v538
      %v540 = vpop.f32.mrb[0].mxu0
      %v541 = vpop.f32.mrb[0].mxu0
      %v542 = vadd.f32 %v383, %v541
      %v543 = vpop.f32.mrb[0].mxu0
      %544 = vmatprep.mubr.bf16.mxu0 %v459
      %545 = vmatmul.mubr.bf16.gmra.mrb[0].mxu0 %v356
      %v546 = vpop.f32.mrb[0].mxu0
      %v547 = vadd.f32 %v383, %v546
      %v548 = vpop.f32.mrb[0].mxu0
      %v549 = vpop.f32.mrb[0].mxu0
      %v550 = vadd.f32 %v383, %v549
      %v551 = vpop.f32.mrb[0].mxu0
      %552 = vmatprep.mubr.bf16.mxu0 %v462
      %553 = vmatmul.mubr.bf16.gmra.mrb[0].mxu0 %v358
      %v554 = vpop.f32.mrb[0].mxu0
      %v555 = vadd.f32 %v383, %v554
      %v556 = vpop.f32.mrb[0].mxu0
      %v557 = vpop.f32.mrb[0].mxu0
      %v558 = vadd.f32 %v383, %v557
      %v559 = vpop.f32.mrb[0].mxu0
      %560 = vdwg.mxu0
      %v561 = vmax.f32 %v499, 0.0
      %v562 = vmax.f32 %v502, 0.0
      %v563 = vmax.f32 %v507, 0.0
      %v564 = vmax.f32 %v510, 0.0
      %v565 = vmax.f32 %v515, 0.0
      %v566 = vmax.f32 %v518, 0.0
      %v567 = vmax.f32 %v523, 0.0
      %v568 = vmax.f32 %v526, 0.0
      %v569 = vmax.f32 %v531, 0.0
      %v570 = vmax.f32 %v534, 0.0
      %v571 = vmax.f32 %v539, 0.0
      %v572 = vmax.f32 %v542, 0.0
      %v573 = vmax.f32 %v547, 0.0
      %v574 = vmax.f32 %v550, 0.0
      %v575 = vmax.f32 %v555, 0.0
      %v576 = vmax.f32 %v558, 0.0
      %v577 = vpack.c.bf16 %v562, %v561
      %v578 = vpack.c.bf16 %v564, %v563
      %v579 = vpack.c.bf16 %v566, %v565
      %v580 = vpack.c.bf16 %v568, %v567
      %v581 = vpack.c.bf16 %v570, %v569
      %v582 = vpack.c.bf16 %v572, %v571
      %v583 = vpack.c.bf16 %v574, %v573
      %v584 = vpack.c.bf16 %v576, %v575
      %v585 = vld [vmem:[%s3] sm:$0xf]
      %v586 = vld [vmem:[%s3 + $0x4] sm:$0xf]
      %v587 = vld [vmem:[%s3 + $0x8] sm:$0xf]
      %v588 = vld [vmem:[%s3 + $0xc] sm:$0xf]
      %v589 = vld [vmem:[%s3 + $0x10] sm:$0xf]
      %v590 = vld [vmem:[%s3 + $0x14] sm:$0xf]
      %v591 = vld [vmem:[%s3 + $0x18] sm:$0xf]
      %v592 = vld [vmem:[%s3 + $0x1c] sm:$0xf]
      %v593 = vld [vmem:[%s3 + $0x20] sm:$0xf]
      %v594 = vld [vmem:[%s3 + $0x24] sm:$0xf]
      %v595 = vld [vmem:[%s3 + $0x28] sm:$0xf]
      %v596 = vld [vmem:[%s3 + $0x2c] sm:$0xf]
      %v597 = vld [vmem:[%s3 + $0x30] sm:$0xf]
      %v598 = vld [vmem:[%s3 + $0x34] sm:$0xf]
      %v599 = vld [vmem:[%s3 + $0x38] sm:$0xf]
      %v600 = vld [vmem:[%s3 + $0x3c] sm:$0xf]
      %v601 = vld [vmem:[%s4] sm:$0x1]
      %v603 = vlaneseq
      %v604 = vshrl.u32 %v603, 7
      %v605 = vsub.s32 0, %v604
      %v606 = vrot.slane %v601, %v605
      %v624 = vunpack.c.l.b16 %v585
      %v625 = vunpack.c.l.b16 %v586
      %v626 = vunpack.c.l.b16 %v587
      %v627 = vunpack.c.l.b16 %v588
      %v628 = vunpack.c.l.b16 %v589
      %v629 = vunpack.c.l.b16 %v590
      %v630 = vunpack.c.l.b16 %v591
      %v631 = vunpack.c.l.b16 %v592
      %v632 = vunpack.c.l.b16 %v593
      %v633 = vunpack.c.l.b16 %v594
      %v634 = vunpack.c.l.b16 %v595
      %v635 = vunpack.c.l.b16 %v596
      %v636 = vunpack.c.l.b16 %v597
      %v637 = vunpack.c.l.b16 %v598
      %v638 = vunpack.c.l.b16 %v599
      %v639 = vunpack.c.l.b16 %v600
      %v640 = vpack.c.b16 %v625, %v624
      %v641 = vpack.c.b16 %v627, %v626
      %v642 = vpack.c.b16 %v629, %v628
      %v643 = vpack.c.b16 %v631, %v630
      %v644 = vpack.c.b16 %v633, %v632
      %v645 = vpack.c.b16 %v635, %v634
      %v646 = vpack.c.b16 %v637, %v636
      %v647 = vpack.c.b16 %v639, %v638
      %656 = vmatprep.subr.bf16.mxu0 0
      %657 = vmatpush1.bf16.msra.mxu0 %v640
      %658 = vmatprep.subr.bf16.mxu0 0
      %659 = vmatpush1.bf16.msra.mxu0 %v641
      %660 = vmatprep.subr.bf16.mxu0 0
      %661 = vmatpush1.bf16.msra.mxu0 %v642
      %662 = vmatprep.subr.bf16.mxu0 0
      %663 = vmatpush1.bf16.msra.mxu0 %v643
      %664 = vmatprep.subr.bf16.mxu0 0
      %665 = vmatpush1.bf16.msra.mxu0 %v644
      %666 = vmatprep.subr.bf16.mxu0 0
      %667 = vmatpush1.bf16.msra.mxu0 %v645
      %668 = vmatprep.subr.bf16.mxu0 0
      %669 = vmatpush1.bf16.msra.mxu0 %v646
      %670 = vmatprep.subr.bf16.mxu0 0
      %671 = vmatpush1.bf16.msra.mxu0 %v647
      %672 = vmatprep.subr.bf16.mxu0 0
      %673 = vmatpush1.bf16.msra.mxu0 0
      %674 = vmatprep.subr.bf16.mxu0 0
      %675 = vmatpush1.bf16.msra.mxu0 0
      %676 = vmatprep.subr.bf16.mxu0 0
      %677 = vmatpush1.bf16.msra.mxu0 0
      %678 = vmatprep.subr.bf16.mxu0 0
      %679 = vmatpush1.bf16.msra.mxu0 0
      %680 = vmatprep.subr.bf16.mxu0 0
      %681 = vmatpush1.bf16.msra.mxu0 0
      %682 = vmatprep.subr.bf16.mxu0 0
      %683 = vmatpush1.bf16.msra.mxu0 0
      %684 = vmatprep.subr.bf16.mxu0 0
      %685 = vmatpush1.bf16.msra.mxu0 0
      %686 = vmatprep.subr.bf16.mxu0 0
      %687 = vmatpush1.bf16.msra.mxu0 0
      %688 = vmatprep.mubr.bf16.mxu0 0
      %689 = vmatmul.mubr.bf16.gmra.mrb[0].mxu0 %v577
      %v690 = vpop.f32.mrb[0].mxu0
      %v691 = vadd.f32 %v606, %v690
      %v692 = vpop.f32.mrb[0].mxu0
      %v693 = vpop.f32.mrb[0].mxu0
      %v694 = vadd.f32 %v606, %v693
      %v695 = vpop.f32.mrb[0].mxu0
      %696 = vmatprep.mubr.bf16.mxu0 0
      %697 = vmatmul.mubr.bf16.gmra.mrb[0].mxu0 %v578
      %v698 = vpop.f32.mrb[0].mxu0
      %v699 = vadd.f32 %v606, %v698
      %v700 = vpop.f32.mrb[0].mxu0
      %v701 = vpop.f32.mrb[0].mxu0
      %v702 = vadd.f32 %v606, %v701
      %v703 = vpop.f32.mrb[0].mxu0
      %704 = vmatprep.mubr.bf16.mxu0 0
      %705 = vmatmul.mubr.bf16.gmra.mrb[0].mxu0 %v579
      %v706 = vpop.f32.mrb[0].mxu0
      %v707 = vadd.f32 %v606, %v706
      %v708 = vpop.f32.mrb[0].mxu0
      %v709 = vpop.f32.mrb[0].mxu0
      %v710 = vadd.f32 %v606, %v709
      %v711 = vpop.f32.mrb[0].mxu0
      %712 = vmatprep.mubr.bf16.mxu0 0
      %713 = vmatmul.mubr.bf16.gmra.mrb[0].mxu0 %v580
      %v714 = vpop.f32.mrb[0].mxu0
      %v715 = vadd.f32 %v606, %v714
      %v716 = vpop.f32.mrb[0].mxu0
      %v717 = vpop.f32.mrb[0].mxu0
      %v718 = vadd.f32 %v606, %v717
      %v719 = vpop.f32.mrb[0].mxu0
      %720 = vmatprep.mubr.bf16.mxu0 0
      %721 = vmatmul.mubr.bf16.gmra.mrb[0].mxu0 %v581
      %v722 = vpop.f32.mrb[0].mxu0
      %v723 = vadd.f32 %v606, %v722
      %v724 = vpop.f32.mrb[0].mxu0
      %v725 = vpop.f32.mrb[0].mxu0
      %v726 = vadd.f32 %v606, %v725
      %v727 = vpop.f32.mrb[0].mxu0
      %728 = vmatprep.mubr.bf16.mxu0 0
      %729 = vmatmul.mubr.bf16.gmra.mrb[0].mxu0 %v582
      %v730 = vpop.f32.mrb[0].mxu0
      %v731 = vadd.f32 %v606, %v730
      %v732 = vpop.f32.mrb[0].mxu0
      %v733 = vpop.f32.mrb[0].mxu0
      %v734 = vadd.f32 %v606, %v733
      %v735 = vpop.f32.mrb[0].mxu0
      %736 = vmatprep.mubr.bf16.mxu0 0
      %737 = vmatmul.mubr.bf16.gmra.mrb[0].mxu0 %v583
      %v738 = vpop.f32.mrb[0].mxu0
      %v739 = vadd.f32 %v606, %v738
      %v740 = vpop.f32.mrb[0].mxu0
      %v741 = vpop.f32.mrb[0].mxu0
      %v742 = vadd.f32 %v606, %v741
      %v743 = vpop.f32.mrb[0].mxu0
      %744 = vmatprep.mubr.bf16.mxu0 0
      %745 = vmatmul.mubr.bf16.gmra.mrb[0].mxu0 %v584
      %v746 = vpop.f32.mrb[0].mxu0
      %v747 = vadd.f32 %v606, %v746
      %v748 = vpop.f32.mrb[0].mxu0
      %v749 = vpop.f32.mrb[0].mxu0
      %v750 = vadd.f32 %v606, %v749
      %v751 = vpop.f32.mrb[0].mxu0
      %752 = vdwg.mxu0
      %v753 = vmax.f32 %v691, 0.0
      %v754 = vmax.f32 %v694, 0.0
      %v755 = vmax.f32 %v699, 0.0
      %v756 = vmax.f32 %v702, 0.0
      %v757 = vmax.f32 %v707, 0.0
      %v758 = vmax.f32 %v710, 0.0
      %v759 = vmax.f32 %v715, 0.0
      %v760 = vmax.f32 %v718, 0.0
      %v761 = vmax.f32 %v723, 0.0
      %v762 = vmax.f32 %v726, 0.0
      %v763 = vmax.f32 %v731, 0.0
      %v764 = vmax.f32 %v734, 0.0
      %v765 = vmax.f32 %v739, 0.0
      %v766 = vmax.f32 %v742, 0.0
      %v767 = vmax.f32 %v747, 0.0
      %v768 = vmax.f32 %v750, 0.0
      %v769 = vpack.c.bf16 %v754, %v753
      %v770 = vpack.c.bf16 %v756, %v755
      %v771 = vpack.c.bf16 %v758, %v757
      %v772 = vpack.c.bf16 %v760, %v759
      %v773 = vpack.c.bf16 %v762, %v761
      %v774 = vpack.c.bf16 %v764, %v763
      %v775 = vpack.c.bf16 %v766, %v765
      %v776 = vpack.c.bf16 %v768, %v767
      %v777 = vld [vmem:[%s5] sm:$0xf]
      %v778 = vld [vmem:[%s5 + $0x4] sm:$0xf]
      %v779 = vld [vmem:[%s5 + $0x8] sm:$0xf]
      %v780 = vld [vmem:[%s5 + $0xc] sm:$0xf]
      %v781 = vld [vmem:[%s5 + $0x10] sm:$0xf]
      %v782 = vld [vmem:[%s5 + $0x14] sm:$0xf]
      %v783 = vld [vmem:[%s5 + $0x18] sm:$0xf]
      %v784 = vld [vmem:[%s5 + $0x1c] sm:$0xf]
      %v785 = vld [vmem:[%s5 + $0x20] sm:$0xf]
      %v786 = vld [vmem:[%s5 + $0x24] sm:$0xf]
      %v787 = vld [vmem:[%s5 + $0x28] sm:$0xf]
      %v788 = vld [vmem:[%s5 + $0x2c] sm:$0xf]
      %v789 = vld [vmem:[%s5 + $0x30] sm:$0xf]
      %v790 = vld [vmem:[%s5 + $0x34] sm:$0xf]
      %v791 = vld [vmem:[%s5 + $0x38] sm:$0xf]
      %v792 = vld [vmem:[%s5 + $0x3c] sm:$0xf]
      %s793 = sld [smem:[#allocation2]]
      %v794 = vstv %s793
      %v811 = vunpack.c.l.b16 %v777
      %v812 = vunpack.c.l.b16 %v778
      %v813 = vunpack.c.l.b16 %v779
      %v814 = vunpack.c.l.b16 %v780
      %v815 = vunpack.c.l.b16 %v781
      %v816 = vunpack.c.l.b16 %v782
      %v817 = vunpack.c.l.b16 %v783
      %v818 = vunpack.c.l.b16 %v784
      %v819 = vunpack.c.l.b16 %v785
      %v820 = vunpack.c.l.b16 %v786
      %v821 = vunpack.c.l.b16 %v787
      %v822 = vunpack.c.l.b16 %v788
      %v823 = vunpack.c.l.b16 %v789
      %v824 = vunpack.c.l.b16 %v790
      %v825 = vunpack.c.l.b16 %v791
      %v826 = vunpack.c.l.b16 %v792
      %v827 = vpack.c.b16 %v812, %v811
      %v828 = vpack.c.b16 %v814, %v813
      %v829 = vpack.c.b16 %v816, %v815
      %v830 = vpack.c.b16 %v818, %v817
      %v831 = vpack.c.b16 %v820, %v819
      %v832 = vpack.c.b16 %v822, %v821
      %v833 = vpack.c.b16 %v824, %v823
      %v834 = vpack.c.b16 %v826, %v825
      %843 = vmatprep.subr.bf16.mxu0 0
      %844 = vmatpush1.bf16.msra.mxu0 %v827
      %845 = vmatprep.subr.bf16.mxu0 0
      %846 = vmatpush1.bf16.msra.mxu0 %v828
      %847 = vmatprep.subr.bf16.mxu0 0
      %848 = vmatpush1.bf16.msra.mxu0 %v829
      %849 = vmatprep.subr.bf16.mxu0 0
      %850 = vmatpush1.bf16.msra.mxu0 %v830
      %851 = vmatprep.subr.bf16.mxu0 0
      %852 = vmatpush1.bf16.msra.mxu0 %v831
      %853 = vmatprep.subr.bf16.mxu0 0
      %854 = vmatpush1.bf16.msra.mxu0 %v832
      %855 = vmatprep.subr.bf16.mxu0 0
      %856 = vmatpush1.bf16.msra.mxu0 %v833
      %857 = vmatprep.subr.bf16.mxu0 0
      %858 = vmatpush1.bf16.msra.mxu0 %v834
      %859 = vmatprep.subr.bf16.mxu0 0
      %860 = vmatpush1.bf16.msra.mxu0 0
      %861 = vmatprep.subr.bf16.mxu0 0
      %862 = vmatpush1.bf16.msra.mxu0 0
      %863 = vmatprep.subr.bf16.mxu0 0
      %864 = vmatpush1.bf16.msra.mxu0 0
      %865 = vmatprep.subr.bf16.mxu0 0
      %866 = vmatpush1.bf16.msra.mxu0 0
      %867 = vmatprep.subr.bf16.mxu0 0
      %868 = vmatpush1.bf16.msra.mxu0 0
      %869 = vmatprep.subr.bf16.mxu0 0
      %870 = vmatpush1.bf16.msra.mxu0 0
      %871 = vmatprep.subr.bf16.mxu0 0
      %872 = vmatpush1.bf16.msra.mxu0 0
      %873 = vmatprep.subr.bf16.mxu0 0
      %874 = vmatpush1.bf16.msra.mxu0 0
      %875 = vmatprep.mubr.bf16.mxu0 0
      %876 = vmatmul.mubr.bf16.gmra.mrb[0].mxu0 %v769
      %v877 = vpop.f32.mrb[0].mxu0
      %v878 = vadd.f32 %v794, %v877
      %v879 = vpop.f32.mrb[0].mxu0
      %v880 = vpop.f32.mrb[0].mxu0
      %v881 = vadd.f32 %v794, %v880
      %v882 = vpop.f32.mrb[0].mxu0
      %883 = vmatprep.mubr.bf16.mxu0 0
      %884 = vmatmul.mubr.bf16.gmra.mrb[0].mxu0 %v770
      %v885 = vpop.f32.mrb[0].mxu0
      %v886 = vadd.f32 %v794, %v885
      %v887 = vpop.f32.mrb[0].mxu0
      %v888 = vpop.f32.mrb[0].mxu0
      %v889 = vadd.f32 %v794, %v888
      %v890 = vpop.f32.mrb[0].mxu0
      %891 = vmatprep.mubr.bf16.mxu0 0
      %892 = vmatmul.mubr.bf16.gmra.mrb[0].mxu0 %v771
      %v893 = vpop.f32.mrb[0].mxu0
      %v894 = vadd.f32 %v794, %v893
      %v895 = vpop.f32.mrb[0].mxu0
      %v896 = vpop.f32.mrb[0].mxu0
      %v897 = vadd.f32 %v794, %v896
      %v898 = vpop.f32.mrb[0].mxu0
      %899 = vmatprep.mubr.bf16.mxu0 0
      %900 = vmatmul.mubr.bf16.gmra.mrb[0].mxu0 %v772
      %v901 = vpop.f32.mrb[0].mxu0
      %v902 = vadd.f32 %v794, %v901
      %v903 = vpop.f32.mrb[0].mxu0
      %v904 = vpop.f32.mrb[0].mxu0
      %v905 = vadd.f32 %v794, %v904
      %v906 = vpop.f32.mrb[0].mxu0
      %907 = vmatprep.mubr.bf16.mxu0 0
      %908 = vmatmul.mubr.bf16.gmra.mrb[0].mxu0 %v773
      %v909 = vpop.f32.mrb[0].mxu0
      %v910 = vadd.f32 %v794, %v909
      %v911 = vpop.f32.mrb[0].mxu0
      %v912 = vpop.f32.mrb[0].mxu0
      %v913 = vadd.f32 %v794, %v912
      %v914 = vpop.f32.mrb[0].mxu0
      %915 = vmatprep.mubr.bf16.mxu0 0
      %916 = vmatmul.mubr.bf16.gmra.mrb[0].mxu0 %v774
      %v917 = vpop.f32.mrb[0].mxu0
      %v918 = vadd.f32 %v794, %v917
      %v919 = vpop.f32.mrb[0].mxu0
      %v920 = vpop.f32.mrb[0].mxu0
      %v921 = vadd.f32 %v794, %v920
      %v922 = vpop.f32.mrb[0].mxu0
      %923 = vmatprep.mubr.bf16.mxu0 0
      %924 = vmatmul.mubr.bf16.gmra.mrb[0].mxu0 %v775
      %v925 = vpop.f32.mrb[0].mxu0
      %v926 = vadd.f32 %v794, %v925
      %v927 = vpop.f32.mrb[0].mxu0
      %v928 = vpop.f32.mrb[0].mxu0
      %v929 = vadd.f32 %v794, %v928
      %v930 = vpop.f32.mrb[0].mxu0
      %931 = vmatprep.mubr.bf16.mxu0 0
      %932 = vmatmul.mubr.bf16.gmra.mrb[0].mxu0 %v776
      %v933 = vpop.f32.mrb[0].mxu0
      %v934 = vadd.f32 %v794, %v933
      %v935 = vpop.f32.mrb[0].mxu0
      %v936 = vpop.f32.mrb[0].mxu0
      %v937 = vadd.f32 %v794, %v936
      %v938 = vpop.f32.mrb[0].mxu0
      %939 = vdwg.mxu0
      %v940 = vxor.u32 %v878, 2147483648
      %v941 = vxor.u32 %v881, 2147483648
      %v942 = vxor.u32 %v886, 2147483648
      %v943 = vxor.u32 %v889, 2147483648
      %v944 = vxor.u32 %v894, 2147483648
      %v945 = vxor.u32 %v897, 2147483648
      %v946 = vxor.u32 %v902, 2147483648
      %v947 = vxor.u32 %v905, 2147483648
      %v948 = vxor.u32 %v910, 2147483648
      %v949 = vxor.u32 %v913, 2147483648
      %v950 = vxor.u32 %v918, 2147483648
      %v951 = vxor.u32 %v921, 2147483648
      %v952 = vxor.u32 %v926, 2147483648
      %v953 = vxor.u32 %v929, 2147483648
      %v954 = vxor.u32 %v934, 2147483648
      %v955 = vxor.u32 %v937, 2147483648
      %v956 = vmul.f32 %v940, 1.442695
      %v957 = vpow.pop %v956
      %v958 = vmul.f32 %v941, 1.442695
      %v959 = vpow.pop %v958
      %v960 = vmul.f32 %v942, 1.442695
      %v961 = vpow.pop %v960
      %v962 = vmul.f32 %v943, 1.442695
      %v963 = vpow.pop %v962
      %v964 = vmul.f32 %v944, 1.442695
      %v965 = vpow.pop %v964
      %v966 = vmul.f32 %v945, 1.442695
      %v967 = vpow.pop %v966
      %v968 = vmul.f32 %v946, 1.442695
      %v969 = vpow.pop %v968
      %v970 = vmul.f32 %v947, 1.442695
      %v971 = vpow.pop %v970
      %v972 = vmul.f32 %v948, 1.442695
      %v973 = vpow.pop %v972
      %v974 = vmul.f32 %v949, 1.442695
      %v975 = vpow.pop %v974
      %v976 = vmul.f32 %v950, 1.442695
      %v977 = vpow.pop %v976
      %v978 = vmul.f32 %v951, 1.442695
      %v979 = vpow.pop %v978
      %v980 = vmul.f32 %v952, 1.442695
      %v981 = vpow.pop %v980
      %v982 = vmul.f32 %v953, 1.442695
      %v983 = vpow.pop %v982
      %v984 = vmul.f32 %v954, 1.442695
      %v985 = vpow.pop %v984
      %v986 = vmul.f32 %v955, 1.442695
      %v987 = vpow.pop %v986
      %v988 = vadd.f32 %v957, 1.0
      %v989 = vadd.f32 %v959, 1.0
      %v990 = vadd.f32 %v961, 1.0
      %v991 = vadd.f32 %v963, 1.0
      %v992 = vadd.f32 %v965, 1.0
      %v993 = vadd.f32 %v967, 1.0
      %v994 = vadd.f32 %v969, 1.0
      %v995 = vadd.f32 %v971, 1.0
      %v996 = vadd.f32 %v973, 1.0
      %v997 = vadd.f32 %v975, 1.0
      %v998 = vadd.f32 %v977, 1.0
      %v999 = vadd.f32 %v979, 1.0
      %v1000 = vadd.f32 %v981, 1.0
      %v1001 = vadd.f32 %v983, 1.0
      %v1002 = vadd.f32 %v985, 1.0
      %v1003 = vadd.f32 %v987, 1.0
      %v1004 = vrcp.pop %v988
      %v1005 = vmul.f32 1.0, %v1004
      %v1006 = vrcp.pop %v989
      %v1007 = vmul.f32 1.0, %v1006
      %v1008 = vrcp.pop %v990
      %v1009 = vmul.f32 1.0, %v1008
      %v1010 = vrcp.pop %v991
      %v1011 = vmul.f32 1.0, %v1010
      %v1012 = vrcp.pop %v992
      %v1013 = vmul.f32 1.0, %v1012
      %v1014 = vrcp.pop %v993
      %v1015 = vmul.f32 1.0, %v1014
      %v1016 = vrcp.pop %v994
      %v1017 = vmul.f32 1.0, %v1016
      %v1018 = vrcp.pop %v995
      %v1019 = vmul.f32 1.0, %v1018
      %v1020 = vrcp.pop %v996
      %v1021 = vmul.f32 1.0, %v1020
      %v1022 = vrcp.pop %v997
      %v1023 = vmul.f32 1.0, %v1022
      %v1024 = vrcp.pop %v998
      %v1025 = vmul.f32 1.0, %v1024
      %v1026 = vrcp.pop %v999
      %v1027 = vmul.f32 1.0, %v1026
      %v1028 = vrcp.pop %v1000
      %v1029 = vmul.f32 1.0, %v1028
      %v1030 = vrcp.pop %v1001
      %v1031 = vmul.f32 1.0, %v1030
      %v1032 = vrcp.pop %v1002
      %v1033 = vmul.f32 1.0, %v1032
      %v1034 = vrcp.pop %v1003
      %v1035 = vmul.f32 1.0, %v1034
      %vm1036 = vcmask 7168
      %1037 = vst.msk [vmem:[%s309] sm:$0xff] %vm1036, %v1005
      %1038 = vst.msk [vmem:[%s309 + $0x8] sm:$0xff] %vm1036, %v1007
      %1039 = vst.msk [vmem:[%s309 + $0x10] sm:$0xff] %vm1036, %v1009
      %1040 = vst.msk [vmem:[%s309 + $0x18] sm:$0xff] %vm1036, %v1011
      %1041 = vst.msk [vmem:[%s309 + $0x20] sm:$0xff] %vm1036, %v1013
      %1042 = vst.msk [vmem:[%s309 + $0x28] sm:$0xff] %vm1036, %v1015
      %1043 = vst.msk [vmem:[%s309 + $0x30] sm:$0xff] %vm1036, %v1017
      %1044 = vst.msk [vmem:[%s309 + $0x38] sm:$0xff] %vm1036, %v1019
      %1045 = vst.msk [vmem:[%s309 + $0x40] sm:$0xff] %vm1036, %v1021
      %1046 = vst.msk [vmem:[%s309 + $0x48] sm:$0xff] %vm1036, %v1023
      %1047 = vst.msk [vmem:[%s309 + $0x50] sm:$0xff] %vm1036, %v1025
      %1048 = vst.msk [vmem:[%s309 + $0x58] sm:$0xff] %vm1036, %v1027
      %1049 = vst.msk [vmem:[%s309 + $0x60] sm:$0xff] %vm1036, %v1029
      %1050 = vst.msk [vmem:[%s309 + $0x68] sm:$0xff] %vm1036, %v1031
      %1051 = vst.msk [vmem:[%s309 + $0x70] sm:$0xff] %vm1036, %v1033
      %1052 = vst.msk [vmem:[%s309 + $0x78] sm:$0xff] %vm1036, %v1035
      %s1053 = smul.u32 16, %s19
      %p1054 = scmp.lt.s32.totalorder %s1053, 31
      %s1055 = scalar_select %p1054, %s1053, 31
      %s1056 = smul.addr %s1055, 8
      %s1057 = scalar_lea.vmem %s7, %s1056
      // Predicated region
      $region49: #{tpu_custom_call.1} parent=47 // pred_check
        %p1058 = pneg %p189
      $region50: #{tpu_custom_call.1} parent=47 // pred_check_branch
        %1060 = sbr.rel (%p1058) target = $region52
      $region51: #{tpu_custom_call.1} parent=47 // pred_region
        %s1061 = smul.u32 16, %s19
      $region52: #{tpu_custom_call.1} parent=47 // pred_fallthru
        _
    $region48: #{tpu_custom_call.1} parent=5 // pred_fallthru
      _
    %p1062 = scmp.le.s32.totalorder 2, %s14
    // Predicated region
    $region53: #{tpu_custom_call.1} parent=5 // pred_check
      %p1063 = pneg %p1062
    $region54: #{tpu_custom_call.1} parent=5 // pred_check_branch
      %1065 = sbr.rel (%p1063) target = $region56
    $region55: #{tpu_custom_call.1} parent=5 // pred_region
      %s1066 = ssub.s32 %s14, 2
      // Predicated region
      $region57: #{tpu_custom_call.1} parent=55 // pred_check
        %p1067 = pneg %p195
      $region58: #{tpu_custom_call.1} parent=55 // pred_check_branch
        %1069 = sbr.rel (%p1067) target = $region60
      $region59: #{tpu_custom_call.1} parent=55 // pred_region
        %s1070 = smul.u32 16, %s20
        %p1071 = scmp.lt.s32.totalorder %s1070, 31
        %s1072 = scalar_select %p1071, %s1070, 31
        %s1073 = smul.addr %s1072, 8
        %s1074 = scalar_lea.vmem %s7, %s1073
      $region60: #{tpu_custom_call.1} parent=55 // pred_fallthru
        _
    $region56: #{tpu_custom_call.1} parent=5 // pred_fallthru
      _
  $region6: #{tpu_custom_call.1} parent=0 // loop_footer
    %s18 = sadd.s32 1, %s14
  $region7: #{tpu_custom_call.1} parent=0 // loop_footer_branch
    %13 = sbr.rel target = $region3
  $region8: #{tpu_custom_call.1} parent=0 // loop_exit
    _

</llo_original>
